<compile_context>
chip_gen: v7x
topology: tpu7x:2x2x1
jax: 0.10.0
libtpu: 0.0.40
codegen_flags: <defaults>
</compile_context>

<pallas_src>
import jax
import jax.numpy as jnp
from jax.experimental import pallas as pl
from jax.experimental.pallas import tpu as pltpu


def _round_up(x, m):
    return (x + m - 1) // m * m


def simple_nn_kernel(ids_ref, xo_ref, ew1_ref, w1o_ref, b1_ref,
                     w2_ref, b2_ref, w3_ref, b3_ref, o_ref):
    """Feature-major fused forward.  Shapes inside the kernel (TB = batch tile on lanes):
         ids (1,TB) i32 | xo (in,TB) bf16 | ew1 (48,n_emb) bf16 | w1o (48,in) bf16
         w2 (24,48) bf16 | w3 (out,24) bf16 | biases (*,1) f32 | out (out,TB) f32
    """
    ids = ids_ref[...]                                          # (1, TB) int32
    tb = ids.shape[1]
    n_emb = ew1_ref.shape[1]

    # one-hot(id)^T: (n_emb, TB).  Exact row selector; 0.0/1.0 are exact in bf16.
    # Note: out-of-range ids silently select a zero embedding row (PyTorch would raise).
    iota = jax.lax.broadcasted_iota(jnp.int32, (n_emb, tb), 0)
    onehot = (iota == ids).astype(jnp.bfloat16)

    # fc1 + ReLU, with the embedding matmul pre-folded into ew1 (exact: both ops linear).
    h1 = (jnp.dot(ew1_ref[...], onehot, preferred_element_type=jnp.float32)
          + jnp.dot(w1o_ref[...], xo_ref[...], preferred_element_type=jnp.float32)
          + b1_ref[...])                                        # (48, TB) f32
    h1 = jnp.maximum(h1, 0.0)

    # fc2 + ReLU
    h2 = jnp.dot(w2_ref[...], h1.astype(jnp.bfloat16),
                 preferred_element_type=jnp.float32) + b2_ref[...]   # (24, TB) f32
    h2 = jnp.maximum(h2, 0.0)

    # fc3 + softmax over the class axis (axis 0 in this layout), numerically stable.
    logits = jnp.dot(w3_ref[...], h2.astype(jnp.bfloat16),
                     preferred_element_type=jnp.float32) + b3_ref[...]  # (out, TB) f32
    m = jnp.max(logits, axis=0, keepdims=True)
    e = jnp.exp(logits - m)
    denom = jnp.sum(e, axis=0, keepdims=True)
    o_ref[...] = (e / denom).astype(o_ref.dtype)                # exact divide


def simple_nn_forward(x_customer, x_other, params, *, block_b=2048):
    """Full forward pass as a single fused pallas_call (gather + concat + MLP + softmax)."""
    emb_table, w1, b1, w2, b2, w3, b3 = params
    n_emb, emb_dim = emb_table.shape
    in_size = x_other.shape[1]
    h1_size = w1.shape[1]
    h2_size = w2.shape[1]
    out_size = w3.shape[1]
    B = x_other.shape[0]

    # ---- batch tiling: batch lives on the 128-wide lane axis ----
    B128 = _round_up(B, 128)
    if B128 == 128:
        TB, B_pad = B, B                        # single full-extent tile (grid = 1)
    else:
        n128 = B128 // 128
        # tiles must be multiples of 128 lanes when gridding; cap by block_b and keep
        # >= 2 grid steps so v7x's two TensorCores both get work.
        units = max(1, min(block_b // 128, pl.cdiv(n128, 2)))
        TB = units * 128
        B_pad = _round_up(B, TB)
    grid = (B_pad // TB,)

    # ---- operand prep (one small wrapper-side fusion) ----
    # Fold the embedding matmul into fc1 and transpose everything to feature-major.
    ew1t = (emb_table @ w1[:emb_dim]).T.astype(jnp.bfloat16)    # (48, n_emb)
    w1ot = w1[emb_dim:].T.astype(jnp.bfloat16)                  # (48, in_size)
    w2t = w2.T.astype(jnp.bfloat16)                             # (24, 48)
    w3t = w3.T.astype(jnp.bfloat16)                             # (out, 24)
    b1c = b1.reshape(h1_size, 1).astype(jnp.float32)
    b2c = b2.reshape(h2_size, 1).astype(jnp.float32)
    b3c = b3.reshape(out_size, 1).astype(jnp.float32)

    ids = x_customer.astype(jnp.int32).reshape(1, B)
    xoT = x_other.T.astype(jnp.bfloat16)                        # (in_size, B)
    if B_pad != B:
        ids = jnp.pad(ids, ((0, 0), (0, B_pad - B)))
        xoT = jnp.pad(xoT, ((0, 0), (0, B_pad - B)))

    def batch_block(rows):
        # batch-blocked along the lane axis
        return pl.BlockSpec((rows, TB), lambda i: (0, i))

    def resident(rows, cols):
        # weights/biases: same block every grid step -> stay VMEM-resident
        return pl.BlockSpec((rows, cols), lambda i: (0, 0))

    flops = 2 * B_pad * (n_emb * h1_size + in_size * h1_size
                         + h1_size * h2_size + h2_size * out_size)
    bytes_accessed = (ids.size * 4 + xoT.size * 2 + B_pad * out_size * 4
                      + (ew1t.size + w1ot.size + w2t.size + w3t.size) * 2
                      + (b1c.size + b2c.size + b3c.size) * 4)

    out_t = pl.pallas_call(
        simple_nn_kernel,
        out_shape=jax.ShapeDtypeStruct((out_size, B_pad), jnp.float32),
        grid=grid,
        in_specs=[
            batch_block(1),                      # ids^T
            batch_block(in_size),                # x_other^T (bf16)
            resident(h1_size, n_emb),            # (emb_table @ W1_emb)^T
            resident(h1_size, in_size),          # W1_other^T
            resident(h1_size, 1),                # b1
            resident(h2_size, h1_size),          # W2^T
            resident(h2_size, 1),                # b2
            resident(out_size, h2_size),         # W3^T
            resident(out_size, 1),               # b3
        ],
        out_specs=batch_block(out_size),
        compiler_params=pltpu.CompilerParams(
            dimension_semantics=("parallel",)),  # v7x: batch tiles split across 2 TCs
        cost_estimate=pl.CostEstimate(
            flops=flops,
            transcendentals=B_pad * out_size,
            bytes_accessed=bytes_accessed),
    )(ids, xoT, ew1t, w1ot, b1c, w2t, b2c, w3t, b3c)

    # back to batch-major (B, out_size)
    return out_t[:, :B].T


def init_params(key, num_unique_customer, embedding_dim, input_size, output_size):
    """Deterministic init mimicking PyTorch defaults (N(0,1) embedding; uniform ±1/sqrt(fan_in) linear)."""
    ks = jax.random.split(key, 7)
    d_in = embedding_dim + input_size

    emb_table = jax.random.normal(ks[0], (num_unique_customer, embedding_dim), jnp.float32)

    def linear(kw, kb, fan_in, fan_out):
        bound = 1.0 / jnp.sqrt(fan_in)
        # stored as (in, out) so the math is x @ W  (== PyTorch x @ W.T + b)
        w = jax.random.uniform(kw, (fan_in, fan_out), jnp.float32, -bound, bound)
        b = jax.random.uniform(kb, (1, fan_out), jnp.float32, -bound, bound)
        return w, b

    w1, b1 = linear(ks[1], ks[2], d_in, 48)
    w2, b2 = linear(ks[3], ks[4], 48, 24)
    w3, b3 = linear(ks[5], ks[6], 24, output_size)
    return (emb_table, w1, b1, w2, b2, w3, b3)


def reference_forward(x_customer, x_other, params):
    """Pure-f32 JAX reference matching the PyTorch module exactly."""
    emb_table, w1, b1, w2, b2, w3, b3 = params
    x = jnp.concatenate([jnp.take(emb_table, x_customer, axis=0), x_other], axis=1)
    h1 = jax.nn.relu(x @ w1 + b1)
    h2 = jax.nn.relu(h1 @ w2 + b2)
    return jax.nn.softmax(h2 @ w3 + b3, axis=1)


if __name__ == "__main__":
    # Small shapes consistent with the module's forward
    num_unique_customer = 16
    embedding_dim = 8
    input_size = 24
    output_size = 8
    batch = 8

    key = jax.random.PRNGKey(0)
    k_ids, k_other, k_params = jax.random.split(key, 3)

    x_customer = jax.random.randint(k_ids, (batch,), 0, num_unique_customer, dtype=jnp.int32)
    x_other = jax.random.normal(k_other, (batch, input_size), jnp.float32)

    params = init_params(k_params, num_unique_customer, embedding_dim, input_size, output_size)

    out = simple_nn_forward(x_customer, x_other, params)
    out = jax.block_until_ready(out)

    ref = reference_forward(x_customer, x_other, params)
    assert out.shape == (batch, output_size)
    # bf16 MXU operands (f32 accumulate) bound the deviation from the f32 reference
    # well below this tolerance; the softmax divide itself is exact.
    assert jnp.allclose(out, ref, atol=2e-2, rtol=2e-2), "mismatch vs JAX reference"
    assert jnp.allclose(jnp.sum(out, axis=1), 1.0, atol=1e-4), "softmax rows must sum to ~1"

    print("KERNEL_OK")
</pallas_src>

<mosaic_0001>
module attributes {stable_mosaic.version = 11 : i64} {
  func.func @simple_nn_kernel(%arg0: i32, %arg1: memref<1x8xi32, #tpu.memory_space<vmem>>, %arg2: memref<24x8xbf16, #tpu.memory_space<vmem>>, %arg3: memref<48x16xbf16, #tpu.memory_space<vmem>>, %arg4: memref<48x24xbf16, #tpu.memory_space<vmem>>, %arg5: memref<48x1xf32, #tpu.memory_space<vmem>>, %arg6: memref<24x48xbf16, #tpu.memory_space<vmem>>, %arg7: memref<24x1xf32, #tpu.memory_space<vmem>>, %arg8: memref<8x24xbf16, #tpu.memory_space<vmem>>, %arg9: memref<8x1xf32, #tpu.memory_space<vmem>>, %arg10: memref<8x8xf32, #tpu.memory_space<vmem>>) attributes {dimension_semantics = [#tpu.dimension_semantics<parallel>], iteration_bounds = array<i64: 1>, scalar_prefetch = 0 : i64, scratch_operands = 0 : i64, tpu.core_type = #tpu.core_type<tc>, window_params = [{transform_indices = @transform_0, window_bounds = array<i64: 1, 8>}, {transform_indices = @transform_1, window_bounds = array<i64: 24, 8>}, {pipeline_mode = #tpu.pipeline_mode<synchronous>, transform_indices = @transform_2, window_bounds = array<i64: 48, 16>}, {pipeline_mode = #tpu.pipeline_mode<synchronous>, transform_indices = @transform_3, window_bounds = array<i64: 48, 24>}, {pipeline_mode = #tpu.pipeline_mode<synchronous>, transform_indices = @transform_4, window_bounds = array<i64: 48, 1>}, {pipeline_mode = #tpu.pipeline_mode<synchronous>, transform_indices = @transform_5, window_bounds = array<i64: 24, 48>}, {pipeline_mode = #tpu.pipeline_mode<synchronous>, transform_indices = @transform_6, window_bounds = array<i64: 24, 1>}, {pipeline_mode = #tpu.pipeline_mode<synchronous>, transform_indices = @transform_7, window_bounds = array<i64: 8, 24>}, {pipeline_mode = #tpu.pipeline_mode<synchronous>, transform_indices = @transform_8, window_bounds = array<i64: 8, 1>}, {transform_indices = @transform_9, window_bounds = array<i64: 8, 8>}]} {
    %c0 = arith.constant 0 : index
    %c0_0 = arith.constant 0 : index
    %0 = vector.load %arg1[%c0, %c0_0] : memref<1x8xi32, #tpu.memory_space<vmem>>, vector<1x8xi32>
    %1 = tpu.iota {dimensions = array<i32: 0>} : vector<16x8xi32>
    %2 = vector.broadcast %0 : vector<1x8xi32> to vector<16x8xi32>
    %3 = arith.cmpi eq, %1, %2 : vector<16x8xi32>
    %4 = arith.extui %3 : vector<16x8xi1> to vector<16x8xi32>
    %5 = arith.sitofp %4 : vector<16x8xi32> to vector<16x8xf32>
    %6 = arith.truncf %5 : vector<16x8xf32> to vector<16x8xbf16>
    %c0_1 = arith.constant 0 : index
    %c0_2 = arith.constant 0 : index
    %7 = vector.load %arg3[%c0_1, %c0_2] : memref<48x16xbf16, #tpu.memory_space<vmem>>, vector<48x16xbf16>
    %cst = arith.constant dense<0.000000e+00> : vector<48x8xf32>
    %8 = tpu.matmul %7, %6, %cst {dimension_numbers = #tpu.dot_dimension_numbers<[1], [0], [0], [1], [0, 0, 1, 1], [], []>} : vector<48x16xbf16>, vector<16x8xbf16>, vector<48x8xf32> -> vector<48x8xf32>
    %c0_3 = arith.constant 0 : index
    %c0_4 = arith.constant 0 : index
    %9 = vector.load %arg4[%c0_3, %c0_4] : memref<48x24xbf16, #tpu.memory_space<vmem>>, vector<48x24xbf16>
    %c0_5 = arith.constant 0 : index
    %c0_6 = arith.constant 0 : index
    %10 = vector.load %arg2[%c0_5, %c0_6] : memref<24x8xbf16, #tpu.memory_space<vmem>>, vector<24x8xbf16>
    %cst_7 = arith.constant dense<0.000000e+00> : vector<48x8xf32>
    %11 = tpu.matmul %9, %10, %cst_7 {dimension_numbers = #tpu.dot_dimension_numbers<[1], [0], [0], [1], [0, 0, 1, 1], [], []>} : vector<48x24xbf16>, vector<24x8xbf16>, vector<48x8xf32> -> vector<48x8xf32>
    %12 = arith.addf %8, %11 : vector<48x8xf32>
    %c0_8 = arith.constant 0 : index
    %c0_9 = arith.constant 0 : index
    %13 = vector.load %arg5[%c0_8, %c0_9] : memref<48x1xf32, #tpu.memory_space<vmem>>, vector<48x1xf32>
    %14 = vector.broadcast %13 : vector<48x1xf32> to vector<48x8xf32>
    %15 = arith.addf %12, %14 : vector<48x8xf32>
    %cst_10 = arith.constant 0.000000e+00 : f32
    %16 = vector.broadcast %cst_10 : f32 to vector<48x8xf32>
    %17 = arith.maximumf %15, %16 : vector<48x8xf32>
    %c0_11 = arith.constant 0 : index
    %c0_12 = arith.constant 0 : index
    %18 = vector.load %arg6[%c0_11, %c0_12] : memref<24x48xbf16, #tpu.memory_space<vmem>>, vector<24x48xbf16>
    %19 = arith.truncf %17 : vector<48x8xf32> to vector<48x8xbf16>
    %cst_13 = arith.constant dense<0.000000e+00> : vector<24x8xf32>
    %20 = tpu.matmul %18, %19, %cst_13 {dimension_numbers = #tpu.dot_dimension_numbers<[1], [0], [0], [1], [0, 0, 1, 1], [], []>} : vector<24x48xbf16>, vector<48x8xbf16>, vector<24x8xf32> -> vector<24x8xf32>
    %c0_14 = arith.constant 0 : index
    %c0_15 = arith.constant 0 : index
    %21 = vector.load %arg7[%c0_14, %c0_15] : memref<24x1xf32, #tpu.memory_space<vmem>>, vector<24x1xf32>
    %22 = vector.broadcast %21 : vector<24x1xf32> to vector<24x8xf32>
    %23 = arith.addf %20, %22 : vector<24x8xf32>
    %cst_16 = arith.constant 0.000000e+00 : f32
    %24 = vector.broadcast %cst_16 : f32 to vector<24x8xf32>
    %25 = arith.maximumf %23, %24 : vector<24x8xf32>
    %c0_17 = arith.constant 0 : index
    %c0_18 = arith.constant 0 : index
    %26 = vector.load %arg8[%c0_17, %c0_18] : memref<8x24xbf16, #tpu.memory_space<vmem>>, vector<8x24xbf16>
    %27 = arith.truncf %25 : vector<24x8xf32> to vector<24x8xbf16>
    %cst_19 = arith.constant dense<0.000000e+00> : vector<8x8xf32>
    %28 = tpu.matmul %26, %27, %cst_19 {dimension_numbers = #tpu.dot_dimension_numbers<[1], [0], [0], [1], [0, 0, 1, 1], [], []>} : vector<8x24xbf16>, vector<24x8xbf16>, vector<8x8xf32> -> vector<8x8xf32>
    %c0_20 = arith.constant 0 : index
    %c0_21 = arith.constant 0 : index
    %29 = vector.load %arg9[%c0_20, %c0_21] : memref<8x1xf32, #tpu.memory_space<vmem>>, vector<8x1xf32>
    %30 = vector.broadcast %29 : vector<8x1xf32> to vector<8x8xf32>
    %31 = arith.addf %28, %30 : vector<8x8xf32>
    %cst_22 = arith.constant dense<0xFF800000> : vector<8xf32>
    %32 = vector.multi_reduction <maximumf>, %31, %cst_22 [0] : vector<8x8xf32> to vector<8xf32>
    %33 = vector.shape_cast %32 : vector<8xf32> to vector<1x8xf32>
    %34 = vector.broadcast %33 : vector<1x8xf32> to vector<8x8xf32>
    %35 = arith.subf %31, %34 : vector<8x8xf32>
    %36 = math.exp %35 : vector<8x8xf32>
    %cst_23 = arith.constant dense<0.000000e+00> : vector<8xf32>
    %37 = vector.multi_reduction <add>, %36, %cst_23 [0] : vector<8x8xf32> to vector<8xf32>
    %38 = vector.shape_cast %37 : vector<8xf32> to vector<1x8xf32>
    %39 = vector.broadcast %38 : vector<1x8xf32> to vector<8x8xf32>
    %40 = arith.divf %36, %39 : vector<8x8xf32>
    %c0_24 = arith.constant 0 : index
    %c0_25 = arith.constant 0 : index
    %41 = vector.load %arg10[%c0_24, %c0_25] : memref<8x8xf32, #tpu.memory_space<vmem>>, vector<8x8xf32>
    tpu.vector_store %arg10[%c0_24, %c0_25], %40 {strides = array<i32>} : memref<8x8xf32, #tpu.memory_space<vmem>>, vector<8x8xf32>,
    return
  }
  func.func @transform_0(%arg0: i32) -> (i32, i32) {
    %c0_i32 = arith.constant 0 : i32
    %c0_i32_0 = arith.constant 0 : i32
    return %c0_i32, %arg0 : i32, i32
  }
  func.func @transform_1(%arg0: i32) -> (i32, i32) {
    %c0_i32 = arith.constant 0 : i32
    %c0_i32_0 = arith.constant 0 : i32
    return %c0_i32, %arg0 : i32, i32
  }
  func.func @transform_2(%arg0: i32) -> (i32, i32) {
    %c0_i32 = arith.constant 0 : i32
    %c0_i32_0 = arith.constant 0 : i32
    %c0_i32_1 = arith.constant 0 : i32
    return %c0_i32, %c0_i32_0 : i32, i32
  }
  func.func @transform_3(%arg0: i32) -> (i32, i32) {
    %c0_i32 = arith.constant 0 : i32
    %c0_i32_0 = arith.constant 0 : i32
    %c0_i32_1 = arith.constant 0 : i32
    return %c0_i32, %c0_i32_0 : i32, i32
  }
  func.func @transform_4(%arg0: i32) -> (i32, i32) {
    %c0_i32 = arith.constant 0 : i32
    %c0_i32_0 = arith.constant 0 : i32
    %c0_i32_1 = arith.constant 0 : i32
    return %c0_i32, %c0_i32_0 : i32, i32
  }
  func.func @transform_5(%arg0: i32) -> (i32, i32) {
    %c0_i32 = arith.constant 0 : i32
    %c0_i32_0 = arith.constant 0 : i32
    %c0_i32_1 = arith.constant 0 : i32
    return %c0_i32, %c0_i32_0 : i32, i32
  }
  func.func @transform_6(%arg0: i32) -> (i32, i32) {
    %c0_i32 = arith.constant 0 : i32
    %c0_i32_0 = arith.constant 0 : i32
    %c0_i32_1 = arith.constant 0 : i32
    return %c0_i32, %c0_i32_0 : i32, i32
  }
  func.func @transform_7(%arg0: i32) -> (i32, i32) {
    %c0_i32 = arith.constant 0 : i32
    %c0_i32_0 = arith.constant 0 : i32
    %c0_i32_1 = arith.constant 0 : i32
    return %c0_i32, %c0_i32_0 : i32, i32
  }
  func.func @transform_8(%arg0: i32) -> (i32, i32) {
    %c0_i32 = arith.constant 0 : i32
    %c0_i32_0 = arith.constant 0 : i32
    %c0_i32_1 = arith.constant 0 : i32
    return %c0_i32, %c0_i32_0 : i32, i32
  }
  func.func @transform_9(%arg0: i32) -> (i32, i32) {
    %c0_i32 = arith.constant 0 : i32
    %c0_i32_0 = arith.constant 0 : i32
    return %c0_i32, %arg0 : i32, i32
  }
}

</mosaic_0001>

<llo_original>
// kernel: tpu_custom_call.1
$region0: #{tpu_custom_call.1}
  #allocation0 [shape = 'u32[]', space=smem, size = 0x4, offset = 0x4, fixed_abs, tag = 'smem constant byte address 0x4 - core index']
  #allocation1 [shape = 'u32[144,128]{1,0:T(1,128)}', space=vmem, size = 0x12000, scoped, tag = 'internal scratch']
  %s0 = inlined_call_operand.vmem [shape: s32[1,8], index: 0, kind: input, shape index: {}]
  %s1 = inlined_call_operand.vmem [shape: bf16[24,8], index: 1, kind: input, shape index: {}]
  %s2 = inlined_call_operand.vmem [shape: bf16[48,16], index: 2, kind: input, shape index: {}]
  %s3 = inlined_call_operand.vmem [shape: bf16[48,24], index: 3, kind: input, shape index: {}]
  %s4 = inlined_call_operand.vmem [shape: f32[48,1], index: 4, kind: input, shape index: {}]
  %s5 = inlined_call_operand.vmem [shape: bf16[24,48], index: 5, kind: input, shape index: {}]
  %s6 = inlined_call_operand.vmem [shape: f32[24,1], index: 6, kind: input, shape index: {}]
  %s7 = inlined_call_operand.vmem [shape: bf16[8,24], index: 7, kind: input, shape index: {}]
  %s8 = inlined_call_operand.vmem [shape: f32[8,1], index: 8, kind: input, shape index: {}]
  %s9 = inlined_call_operand.hbm [shape: f32[8,8], index: 9, kind: output, shape index: {}]
  %s10 = sld [smem:[#allocation0]]
  $region46: #{tpu_custom_call.1} parent=0
    _
  %s12 = ssub.s32 1, %s10
  %s13 = scalar_select 0, %s12, %s10
  $region1: #{tpu_custom_call.1} parent=0
    #allocation2 [shape = 'u8[4096]{0}', space=vmem, size = 0x1000, scoped, tag = 'output window, operand 0, single buffered']
    #allocation3 [shape = 's32[1]{0}', space=sflag, size = 0x4, scoped, tag = 'scoped memory for tpu_custom_call.1']
    %14 = vsyncpa [#allocation3], 0
    // Predicated region
    $region2: #{tpu_custom_call.1} parent=1 // pred_check
      _
    $region3: #{tpu_custom_call.1} parent=1 // pred_check_branch
      %16 = sbr.rel (0) target = $region5
    $region4: #{tpu_custom_call.1} parent=1 // pred_region
      _
    $region5: #{tpu_custom_call.1} parent=1 // pred_fallthru
      _
    // Predicated region
    $region6: #{tpu_custom_call.1} parent=1 // pred_check
      _
    $region7: #{tpu_custom_call.1} parent=1 // pred_check_branch
      %18 = sbr.rel (0) target = $region9
    $region8: #{tpu_custom_call.1} parent=1 // pred_region
      _
    $region9: #{tpu_custom_call.1} parent=1 // pred_fallthru
      _
    // Predicated region
    $region10: #{tpu_custom_call.1} parent=1 // pred_check
      _
    $region11: #{tpu_custom_call.1} parent=1 // pred_check_branch
      %20 = sbr.rel (0) target = $region13
    $region12: #{tpu_custom_call.1} parent=1 // pred_region
      _
    $region13: #{tpu_custom_call.1} parent=1 // pred_fallthru
      _
    // Predicated region
    $region14: #{tpu_custom_call.1} parent=1 // pred_check
      _
    $region15: #{tpu_custom_call.1} parent=1 // pred_check_branch
      %22 = sbr.rel (0) target = $region17
    $region16: #{tpu_custom_call.1} parent=1 // pred_region
      _
    $region17: #{tpu_custom_call.1} parent=1 // pred_fallthru
      _
    // Predicated region
    $region18: #{tpu_custom_call.1} parent=1 // pred_check
      _
    $region19: #{tpu_custom_call.1} parent=1 // pred_check_branch
      %24 = sbr.rel (0) target = $region21
    $region20: #{tpu_custom_call.1} parent=1 // pred_region
      _
    $region21: #{tpu_custom_call.1} parent=1 // pred_fallthru
      _
    // Predicated region
    $region22: #{tpu_custom_call.1} parent=1 // pred_check
      _
    $region23: #{tpu_custom_call.1} parent=1 // pred_check_branch
      %26 = sbr.rel (0) target = $region25
    $region24: #{tpu_custom_call.1} parent=1 // pred_region
      _
    $region25: #{tpu_custom_call.1} parent=1 // pred_fallthru
      _
    // Predicated region
    $region26: #{tpu_custom_call.1} parent=1 // pred_check
      _
    $region27: #{tpu_custom_call.1} parent=1 // pred_check_branch
      %28 = sbr.rel (0) target = $region29
    $region28: #{tpu_custom_call.1} parent=1 // pred_region
      _
    $region29: #{tpu_custom_call.1} parent=1 // pred_fallthru
      _
    // Predicated region
    $region30: #{tpu_custom_call.1} parent=1 // pred_check
      _
    $region31: #{tpu_custom_call.1} parent=1 // pred_check_branch
      %30 = sbr.rel (0) target = $region33
    $region32: #{tpu_custom_call.1} parent=1 // pred_region
      _
    $region33: #{tpu_custom_call.1} parent=1 // pred_fallthru
      _
    // Predicated region
    $region34: #{tpu_custom_call.1} parent=1 // pred_check
      _
    $region35: #{tpu_custom_call.1} parent=1 // pred_check_branch
      %32 = sbr.rel (0) target = $region37
    $region36: #{tpu_custom_call.1} parent=1 // pred_region
      _
    $region37: #{tpu_custom_call.1} parent=1 // pred_fallthru
      _
    %v34 = vld [vmem:[%s0] sm:$0x1]
    %v35 = vlaneseq
    %v36 = vshrl.u32 %v35, 7
    %v37 = vadd.s32 %v36, 8
    %v38 = vlaneseq
    %v39 = vshrl.u32 %v38, 7
    %v40 = vsub.s32 0, %v39
    %v41 = vrot.slane %v34, %v40
    %vm42 = vcmp.eq.s32.totalorder %v36, %v41
    %vm43 = vcmp.eq.s32.totalorder %v37, %v41
    %v44 = vsel %vm42, 1, 0
    %v45 = vsel %vm43, 1, 0
    %v46 = vcvt.s32.f32 %v44
    %v47 = vcvt.s32.f32 %v45
    %v48 = vpack.c.bf16 %v47, %v46
    %v49 = vld [vmem:[%s2] sm:$0xf]
    %v50 = vld [vmem:[%s2 + $0x4] sm:$0xf]
    %v51 = vld [vmem:[%s2 + $0x8] sm:$0xf]
    %v52 = vld [vmem:[%s2 + $0xc] sm:$0xf]
    %v53 = vld [vmem:[%s2 + $0x10] sm:$0xf]
    %v54 = vld [vmem:[%s2 + $0x14] sm:$0xf]
    %v55 = vld [vmem:[%s3] sm:$0xf]
    %v56 = vld [vmem:[%s3 + $0x4] sm:$0xf]
    %v57 = vld [vmem:[%s3 + $0x8] sm:$0xf]
    %v58 = vld [vmem:[%s3 + $0xc] sm:$0xf]
    %v59 = vld [vmem:[%s3 + $0x10] sm:$0xf]
    %v60 = vld [vmem:[%s3 + $0x14] sm:$0xf]
    %v61 = vld [vmem:[%s1] sm:$0xf]
    %v62 = vld [vmem:[%s1 + $0x4] sm:$0xf]
    %v63 = vld [vmem:[%s1 + $0x8] sm:$0xf]
    %v70 = vunpack.c.l.b16 %v55
    %v71 = vunpack.c.l.b16 %v56
    %v72 = vunpack.c.l.b16 %v57
    %v73 = vunpack.c.l.b16 %v58
    %v74 = vunpack.c.l.b16 %v59
    %v75 = vunpack.c.l.b16 %v60
    %v76 = vpack.c.b16 %v71, %v70
    %v77 = vpack.c.b16 %v73, %v72
    %v78 = vpack.c.b16 %v75, %v74
    %v82 = vunpack.c.l.b16 %v61
    %v83 = vunpack.c.l.b16 %v62
    %v84 = vunpack.c.l.b16 %v63
    %v85 = vpack.c.b16 %v83, %v82
    %v86 = vpack.c.b16 %v84, %v84
    %vm88 = vcmask 195584
    %v90 = vsel %vm88, %v76, 0
    %v93 = vsel %vm88, %v77, 0
    %v96 = vsel %vm88, %v78, 0
    %vm98 = vcmask 1043456
    %v100 = vsel %vm98, %v86, 0
    %102 = vmatprep.subr.bf16.mxu0 0
    %103 = vmatpush1.bf16.msra.mxu0 %v85
    %104 = vmatprep.subr.bf16.mxu0 0
    %105 = vmatpush1.bf16.msra.mxu0 %v100
    %106 = vmatprep.subr.bf16.mxu0 0
    %107 = vmatpush1.bf16.msra.mxu0 0
    %108 = vmatprep.subr.bf16.mxu0 0
    %109 = vmatpush1.bf16.msra.mxu0 0
    %110 = vmatprep.subr.bf16.mxu0 0
    %111 = vmatpush1.bf16.msra.mxu0 0
    %112 = vmatprep.subr.bf16.mxu0 0
    %113 = vmatpush1.bf16.msra.mxu0 0
    %114 = vmatprep.subr.bf16.mxu0 0
    %115 = vmatpush1.bf16.msra.mxu0 0
    %116 = vmatprep.subr.bf16.mxu0 0
    %117 = vmatpush1.bf16.msra.mxu0 0
    %118 = vmatprep.subr.bf16.mxu0 0
    %119 = vmatpush1.bf16.msra.mxu0 0
    %120 = vmatprep.subr.bf16.mxu0 0
    %121 = vmatpush1.bf16.msra.mxu0 0
    %122 = vmatprep.subr.bf16.mxu0 0
    %123 = vmatpush1.bf16.msra.mxu0 0
    %124 = vmatprep.subr.bf16.mxu0 0
    %125 = vmatpush1.bf16.msra.mxu0 0
    %126 = vmatprep.subr.bf16.mxu0 0
    %127 = vmatpush1.bf16.msra.mxu0 0
    %128 = vmatprep.subr.bf16.mxu0 0
    %129 = vmatpush1.bf16.msra.mxu0 0
    %130 = vmatprep.subr.bf16.mxu0 0
    %131 = vmatpush1.bf16.msra.mxu0 0
    %132 = vmatprep.subr.bf16.mxu0 0
    %133 = vmatpush1.bf16.msra.mxu0 0
    %134 = vmatprep.mubr.bf16.mxu0 0
    %135 = vmatmul.mubr.bf16.gmra.mrb[0].mxu0 %v90
    %v136 = vpop.f32.mrb[0].mxu0
    %v137 = vadd.f32 0.0, %v136
    %v138 = vpop.f32.mrb[0].mxu0
    %v139 = vpop.f32.mrb[0].mxu0
    %v140 = vadd.f32 0.0, %v139
    %v141 = vpop.f32.mrb[0].mxu0
    %142 = vmatprep.mubr.bf16.mxu0 0
    %143 = vmatmul.mubr.bf16.gmra.mrb[0].mxu0 %v93
    %v144 = vpop.f32.mrb[0].mxu0
    %v145 = vadd.f32 0.0, %v144
    %v146 = vpop.f32.mrb[0].mxu0
    %v147 = vpop.f32.mrb[0].mxu0
    %v148 = vadd.f32 0.0, %v147
    %v149 = vpop.f32.mrb[0].mxu0
    %150 = vmatprep.mubr.bf16.mxu0 0
    %151 = vmatmul.mubr.bf16.gmra.mrb[0].mxu0 %v96
    %v152 = vpop.f32.mrb[0].mxu0
    %v153 = vadd.f32 0.0, %v152
    %v154 = vpop.f32.mrb[0].mxu0
    %v155 = vpop.f32.mrb[0].mxu0
    %v156 = vadd.f32 0.0, %v155
    %v157 = vpop.f32.mrb[0].mxu0
    %158 = vdwg.mxu0
    %v165 = vunpack.c.l.b16 %v49
    %v166 = vunpack.c.l.b16 %v50
    %v167 = vunpack.c.l.b16 %v51
    %v168 = vunpack.c.l.b16 %v52
    %v169 = vunpack.c.l.b16 %v53
    %v170 = vunpack.c.l.b16 %v54
    %v171 = vpack.c.b16 %v166, %v165
    %v172 = vpack.c.b16 %v168, %v167
    %v173 = vpack.c.b16 %v170, %v169
    %vm174 = vcmask 130048
    %v176 = vsel %vm174, %v171, 0
    %v179 = vsel %vm174, %v172, 0
    %v182 = vsel %vm174, %v173, 0
    %184 = vmatprep.subr.bf16.mxu0 0
    %185 = vmatpush1.bf16.msra.mxu0 %v48
    %186 = vmatprep.subr.bf16.mxu0 0
    %187 = vmatpush1.bf16.msra.mxu0 0
    %188 = vmatprep.subr.bf16.mxu0 0
    %189 = vmatpush1.bf16.msra.mxu0 0
    %190 = vmatprep.subr.bf16.mxu0 0
    %191 = vmatpush1.bf16.msra.mxu0 0
    %192 = vmatprep.subr.bf16.mxu0 0
    %193 = vmatpush1.bf16.msra.mxu0 0
    %194 = vmatprep.subr.bf16.mxu0 0
    %195 = vmatpush1.bf16.msra.mxu0 0
    %196 = vmatprep.subr.bf16.mxu0 0
    %197 = vmatpush1.bf16.msra.mxu0 0
    %198 = vmatprep.subr.bf16.mxu0 0
    %199 = vmatpush1.bf16.msra.mxu0 0
    %200 = vmatprep.subr.bf16.mxu0 0
    %201 = vmatpush1.bf16.msra.mxu0 0
    %202 = vmatprep.subr.bf16.mxu0 0
    %203 = vmatpush1.bf16.msra.mxu0 0
    %204 = vmatprep.subr.bf16.mxu0 0
    %205 = vmatpush1.bf16.msra.mxu0 0
    %206 = vmatprep.subr.bf16.mxu0 0
    %207 = vmatpush1.bf16.msra.mxu0 0
    %208 = vmatprep.subr.bf16.mxu0 0
    %209 = vmatpush1.bf16.msra.mxu0 0
    %210 = vmatprep.subr.bf16.mxu0 0
    %211 = vmatpush1.bf16.msra.mxu0 0
    %212 = vmatprep.subr.bf16.mxu0 0
    %213 = vmatpush1.bf16.msra.mxu0 0
    %214 = vmatprep.subr.bf16.mxu0 0
    %215 = vmatpush1.bf16.msra.mxu0 0
    %216 = vmatprep.mubr.bf16.mxu0 0
    %217 = vmatmul.mubr.bf16.gmra.mrb[0].mxu0 %v176
    %v218 = vpop.f32.mrb[0].mxu0
    %v219 = vadd.f32 %v137, %v218
    %v220 = vpop.f32.mrb[0].mxu0
    %v221 = vpop.f32.mrb[0].mxu0
    %v222 = vadd.f32 %v140, %v221
    %v223 = vpop.f32.mrb[0].mxu0
    %224 = vmatprep.mubr.bf16.mxu0 0
    %225 = vmatmul.mubr.bf16.gmra.mrb[0].mxu0 %v179
    %v226 = vpop.f32.mrb[0].mxu0
    %v227 = vadd.f32 %v145, %v226
    %v228 = vpop.f32.mrb[0].mxu0
    %v229 = vpop.f32.mrb[0].mxu0
    %v230 = vadd.f32 %v148, %v229
    %v231 = vpop.f32.mrb[0].mxu0
    %232 = vmatprep.mubr.bf16.mxu0 0
    %233 = vmatmul.mubr.bf16.gmra.mrb[0].mxu0 %v182
    %v234 = vpop.f32.mrb[0].mxu0
    %v235 = vadd.f32 %v153, %v234
    %v236 = vpop.f32.mrb[0].mxu0
    %v237 = vpop.f32.mrb[0].mxu0
    %v238 = vadd.f32 %v156, %v237
    %v239 = vpop.f32.mrb[0].mxu0
    %240 = vdwg.mxu0
    %v241 = vld [vmem:[%s4] sm:$0xff]
    %v242 = vld [vmem:[%s4 + $0x8] sm:$0xff]
    %v243 = vld [vmem:[%s4 + $0x10] sm:$0xff]
    %v244 = vld [vmem:[%s4 + $0x18] sm:$0xff]
    %v245 = vld [vmem:[%s4 + $0x20] sm:$0xff]
    %v246 = vld [vmem:[%s4 + $0x28] sm:$0xff]
    %248 = vset.pattern.permute.xlu0 0
    %249 = vperm.xlu0 %248, %v241
    %v250 = vpop.permute.xlu0 %249
    %253 = vset.pattern.permute.xlu0 0
    %254 = vperm.xlu0 %253, %v242
    %v255 = vpop.permute.xlu0 %254
    %258 = vset.pattern.permute.xlu0 0
    %259 = vperm.xlu0 %258, %v243
    %v260 = vpop.permute.xlu0 %259
    %263 = vset.pattern.permute.xlu0 0
    %264 = vperm.xlu0 %263, %v244
    %v265 = vpop.permute.xlu0 %264
    %268 = vset.pattern.permute.xlu0 0
    %269 = vperm.xlu0 %268, %v245
    %v270 = vpop.permute.xlu0 %269
    %273 = vset.pattern.permute.xlu0 0
    %274 = vperm.xlu0 %273, %v246
    %v275 = vpop.permute.xlu0 %274
    %v277 = vadd.f32 %v219, %v250
    %v278 = vadd.f32 %v222, %v255
    %v279 = vadd.f32 %v227, %v260
    %v280 = vadd.f32 %v230, %v265
    %v281 = vadd.f32 %v235, %v270
    %v282 = vadd.f32 %v238, %v275
    %v283 = vmax.f32 %v277, 0.0
    %v284 = vmax.f32 %v278, 0.0
    %v285 = vmax.f32 %v279, 0.0
    %v286 = vmax.f32 %v280, 0.0
    %v287 = vmax.f32 %v281, 0.0
    %v288 = vmax.f32 %v282, 0.0
    %v289 = vld [vmem:[%s5] sm:$0xf]
    %v290 = vld [vmem:[%s5 + $0x4] sm:$0xf]
    %v291 = vld [vmem:[%s5 + $0x8] sm:$0xf]
    %v292 = vpack.c.bf16 %v284, %v283
    %v293 = vpack.c.bf16 %v286, %v285
    %v294 = vpack.c.bf16 %v288, %v287
    %v295 = vld [vmem:[%s6] sm:$0xff]
    %v296 = vld [vmem:[%s6 + $0x8] sm:$0xff]
    %v297 = vld [vmem:[%s6 + $0x10] sm:$0xff]
    %299 = vset.pattern.permute.xlu0 0
    %300 = vperm.xlu0 %299, %v295
    %v301 = vpop.permute.xlu0 %300
    %304 = vset.pattern.permute.xlu0 0
    %305 = vperm.xlu0 %304, %v296
    %v306 = vpop.permute.xlu0 %305
    %309 = vset.pattern.permute.xlu0 0
    %310 = vperm.xlu0 %309, %v297
    %v311 = vpop.permute.xlu0 %310
    %v316 = vunpack.c.l.b16 %v289
    %v317 = vunpack.c.l.b16 %v290
    %v318 = vunpack.c.l.b16 %v291
    %v319 = vpack.c.b16 %v317, %v316
    %v320 = vpack.c.b16 %v318, %v318
    %vm321 = vcmask 392192
    %v323 = vsel %vm321, %v319, 0
    %v326 = vsel %vm321, %v320, 0
    %328 = vmatprep.subr.bf16.mxu0 0
    %329 = vmatpush1.bf16.msra.mxu0 %v292
    %330 = vmatprep.subr.bf16.mxu0 0
    %331 = vmatpush1.bf16.msra.mxu0 %v293
    %332 = vmatprep.subr.bf16.mxu0 0
    %333 = vmatpush1.bf16.msra.mxu0 %v294
    %334 = vmatprep.subr.bf16.mxu0 0
    %335 = vmatpush1.bf16.msra.mxu0 0
    %336 = vmatprep.subr.bf16.mxu0 0
    %337 = vmatpush1.bf16.msra.mxu0 0
    %338 = vmatprep.subr.bf16.mxu0 0
    %339 = vmatpush1.bf16.msra.mxu0 0
    %340 = vmatprep.subr.bf16.mxu0 0
    %341 = vmatpush1.bf16.msra.mxu0 0
    %342 = vmatprep.subr.bf16.mxu0 0
    %343 = vmatpush1.bf16.msra.mxu0 0
    %344 = vmatprep.subr.bf16.mxu0 0
    %345 = vmatpush1.bf16.msra.mxu0 0
    %346 = vmatprep.subr.bf16.mxu0 0
    %347 = vmatpush1.bf16.msra.mxu0 0
    %348 = vmatprep.subr.bf16.mxu0 0
    %349 = vmatpush1.bf16.msra.mxu0 0
    %350 = vmatprep.subr.bf16.mxu0 0
    %351 = vmatpush1.bf16.msra.mxu0 0
    %352 = vmatprep.subr.bf16.mxu0 0
    %353 = vmatpush1.bf16.msra.mxu0 0
    %354 = vmatprep.subr.bf16.mxu0 0
    %355 = vmatpush1.bf16.msra.mxu0 0
    %356 = vmatprep.subr.bf16.mxu0 0
    %357 = vmatpush1.bf16.msra.mxu0 0
    %358 = vmatprep.subr.bf16.mxu0 0
    %359 = vmatpush1.bf16.msra.mxu0 0
    %360 = vmatprep.mubr.bf16.mxu0 0
    %361 = vmatmul.mubr.bf16.gmra.mrb[0].mxu0 %v323
    %v362 = vpop.f32.mrb[0].mxu0
    %v363 = vadd.f32 %v301, %v362
    %v364 = vpop.f32.mrb[0].mxu0
    %v365 = vpop.f32.mrb[0].mxu0
    %v366 = vadd.f32 %v306, %v365
    %v367 = vpop.f32.mrb[0].mxu0
    %368 = vmatprep.mubr.bf16.mxu0 0
    %369 = vmatmul.mubr.bf16.gmra.mrb[0].mxu0 %v326
    %v370 = vpop.f32.mrb[0].mxu0
    %v371 = vadd.f32 %v311, %v370
    %v372 = vpop.f32.mrb[0].mxu0
    %v373 = vpop.f32.mrb[0].mxu0
    %v374 = vpop.f32.mrb[0].mxu0
    %375 = vdwg.mxu0
    %v376 = vmax.f32 %v363, 0.0
    %v377 = vmax.f32 %v366, 0.0
    %v378 = vmax.f32 %v371, 0.0
    %v379 = vld [vmem:[%s7] sm:$0xf]
    %v380 = vpack.c.bf16 %v377, %v376
    %v381 = vpack.c.bf16 %v378, %v378
    %v382 = vld [vmem:[%s8] sm:$0xff]
    %384 = vset.pattern.permute.xlu0 0
    %385 = vperm.xlu0 %384, %v382
    %v386 = vpop.permute.xlu0 %385
    %v389 = vsel %vm88, %v379, 0
    %v392 = vsel %vm98, %v381, 0
    %394 = vmatprep.subr.bf16.mxu0 0
    %395 = vmatpush1.bf16.msra.mxu0 %v380
    %396 = vmatprep.subr.bf16.mxu0 0
    %397 = vmatpush1.bf16.msra.mxu0 %v392
    %398 = vmatprep.subr.bf16.mxu0 0
    %399 = vmatpush1.bf16.msra.mxu0 0
    %400 = vmatprep.subr.bf16.mxu0 0
    %401 = vmatpush1.bf16.msra.mxu0 0
    %402 = vmatprep.subr.bf16.mxu0 0
    %403 = vmatpush1.bf16.msra.mxu0 0
    %404 = vmatprep.subr.bf16.mxu0 0
    %405 = vmatpush1.bf16.msra.mxu0 0
    %406 = vmatprep.subr.bf16.mxu0 0
    %407 = vmatpush1.bf16.msra.mxu0 0
    %408 = vmatprep.subr.bf16.mxu0 0
    %409 = vmatpush1.bf16.msra.mxu0 0
    %410 = vmatprep.subr.bf16.mxu0 0
    %411 = vmatpush1.bf16.msra.mxu0 0
    %412 = vmatprep.subr.bf16.mxu0 0
    %413 = vmatpush1.bf16.msra.mxu0 0
    %414 = vmatprep.subr.bf16.mxu0 0
    %415 = vmatpush1.bf16.msra.mxu0 0
    %416 = vmatprep.subr.bf16.mxu0 0
    %417 = vmatpush1.bf16.msra.mxu0 0
    %418 = vmatprep.subr.bf16.mxu0 0
    %419 = vmatpush1.bf16.msra.mxu0 0
    %420 = vmatprep.subr.bf16.mxu0 0
    %421 = vmatpush1.bf16.msra.mxu0 0
    %422 = vmatprep.subr.bf16.mxu0 0
    %423 = vmatpush1.bf16.msra.mxu0 0
    %424 = vmatprep.subr.bf16.mxu0 0
    %425 = vmatpush1.bf16.msra.mxu0 0
    %426 = vmatprep.mubr.bf16.mxu0 0
    %427 = vmatmul.mubr.bf16.gmra.mrb[0].mxu0 %v389
    %v428 = vpop.f32.mrb[0].mxu0
    %v429 = vadd.f32 %v386, %v428
    %v430 = vpop.f32.mrb[0].mxu0
    %v431 = vpop.f32.mrb[0].mxu0
    %v432 = vpop.f32.mrb[0].mxu0
    %433 = vdwg.mxu0
    %vm434 = vcmask 64512
    %v435 = vsel %vm434, %v429, -inf
    %v436 = vrot.slane %v435, 4
    %v437 = vmax.f32 %v435, %v436
    %v438 = vrot.slane %v437, 2
    %v439 = vmax.f32 %v437, %v438
    %v440 = vrot.slane %v439, 1
    %v441 = vmax.f32 %v439, %v440
    %v442 = vsub.f32 %v429, %v441
    %v443 = vmul.f32 %v442, 1.442695
    %v444 = vpow.pop %v443
    %v445 = vsel %vm434, %v444, 0.0
    %v446 = vrot.slane %v445, 4
    %v447 = vadd.f32 %v445, %v446
    %v448 = vrot.slane %v447, 2
    %v449 = vadd.f32 %v447, %v448
    %v450 = vrot.slane %v449, 1
    %v451 = vadd.f32 %v449, %v450
    %v452 = vrcp.pop %v451
    %v453 = vmul.f32 %v444, %v452
    %454 = vst.msk [vmem:[#allocation2] sm:$0xff] %vm434, %v453
    // Predicated region
    $region38: #{tpu_custom_call.1} parent=1 // pred_check
      _
    $region39: #{tpu_custom_call.1} parent=1 // pred_check_branch
      %456 = sbr.rel (0) target = $region41
    $region40: #{tpu_custom_call.1} parent=1 // pred_region
      %s458 = ssub.s32 128, 128
      %459 = vsyncadd [#allocation3], %s458
      %s461 = sshll.u32 [#allocation2], 4
      %s462 = int_to_ptr.vmem [resolvable:$true] %s461
      %464 = dma.vmem_to_hbm [thread:$0]  %s462, 128, %s9, [#allocation3]
    $region41: #{tpu_custom_call.1} parent=1 // pred_fallthru
      _
    // Predicated region
    $region42: #{tpu_custom_call.1} parent=1 // pred_check
      _
    $region43: #{tpu_custom_call.1} parent=1 // pred_check_branch
      %466 = sbr.rel (0) target = $region45
    $region44: #{tpu_custom_call.1} parent=1 // pred_region
      %467 = dma.done [#allocation3], 128
    $region45: #{tpu_custom_call.1} parent=1 // pred_fallthru
      _
    %468 = vsyncpa [#allocation3], 1

</llo_original>
